<compile_context>
chip_gen: v7x
topology: tpu7x:2x2x1
jax: 0.10.0
libtpu: 0.0.40
codegen_flags: <defaults>
</compile_context>

<pallas_src>
import jax
import jax.numpy as jnp
from jax.experimental import pallas as pl
from jax.experimental.pallas import tpu as pltpu

WIDTH = 384        # lcm(3, 128): 3 features tile the 128-lane vreg exactly
NUM_CORES = 2      # leading "parallel" grid axis (2 TCs on v7x; no-op elsewhere)
_CHUNK = 512       # static row sub-chunk for in-kernel accumulation


def _round_up(a: int, m: int) -> int:
    return ((a + m - 1) // m) * m


def _make_kernel(rows: int, br: int, nb: int, npc: int, width: int):
    has_partial = (rows % br) != 0
    nb_full = nb - 1 if has_partial else nb          # number of fully valid blocks
    valid_last = rows - (nb - 1) * br                # static valid rows of last block

    def accumulate(x_ref, acc_ref, r1):
        # Accumulate rows [0, r1) of the (br, width) tile into the (8, width)
        # accumulator.  r1 is a static Python int; chunking keeps intermediates
        # small and the adds are pure VALU work (no cross-lane movement).
        r = 0
        while r < r1:
            cnt = min(_CHUNK, r1 - r)
            cf = (cnt // 8) * 8
            if cf:
                acc_ref[...] += jnp.sum(
                    x_ref[r:r + cf, :].reshape(cf // 8, 8, width), axis=0)
            if cnt - cf:
                acc_ref[0:cnt - cf, :] += x_ref[r + cf:r + cnt, :]
            r += cnt

    def kernel(x_ref, wrow_ref, o_ref, acc_ref):
        c = pl.program_id(0)                 # core (parallel axis)
        i = pl.program_id(1)                 # row-block index within this core
        block_id = c * npc + i               # global row-block index (may be >= nb)

        @pl.when(i == 0)
        def _init():
            acc_ref[...] = jnp.zeros_like(acc_ref)

        # Fully valid blocks: plain vector adds, trivially hidden under the DMA.
        @pl.when(block_id < nb_full)
        def _full():
            accumulate(x_ref, acc_ref, br)

        if has_partial:
            # The single partial block: its valid row count is a compile-time
            # constant, so the garbage tail is excluded with static slices.
            @pl.when(block_id == nb - 1)
            def _partial():
                accumulate(x_ref, acc_ref, valid_last)

        # blocks with block_id >= nb (odd split) are simply skipped.

        # Finalize once per core: weight the per-lane column sums, reduce, write.
        @pl.when(i == npc - 1)
        def _finalize():
            partial = jnp.sum(acc_ref[...] * wrow_ref[...])
            o_ref[...] = jnp.zeros((8, 128), jnp.float32) + partial

    return kernel


def _pallas_weighted_sum(x2d, wrow, block_rows):
    """sum over all elements of x2d * (wrow broadcast along rows)."""
    rows = x2d.shape[0]
    if rows >= 8:
        br = min(_round_up(block_rows, 8), (rows // 8) * 8)   # multiple of 8, <= rows
    else:
        br = rows                                             # equals full array dim
    nb = pl.cdiv(rows, br)            # total row-blocks (last may be partial)
    npc = pl.cdiv(nb, NUM_CORES)      # blocks per core

    def x_index_map(c, i):
        # Clamp so the (at most one) extra step of the second core never DMAs
        # out of bounds; its accumulation is skipped in-kernel.
        return (jnp.minimum(c * npc + i, nb - 1), 0)

    out = pl.pallas_call(
        _make_kernel(rows, br, nb, npc, WIDTH),
        out_shape=jax.ShapeDtypeStruct((NUM_CORES * 8, 128), jnp.float32),
        grid=(NUM_CORES, npc),
        in_specs=[
            pl.BlockSpec((br, WIDTH), x_index_map),            # streamed x tiles
            pl.BlockSpec((1, WIDTH), lambda c, i: (0, 0)),     # resident weight row
        ],
        out_specs=pl.BlockSpec((8, 128), lambda c, i: (c, 0)),  # one block per core
        scratch_shapes=[pltpu.VMEM((8, WIDTH), jnp.float32)],   # per-core accumulator
        compiler_params=pltpu.CompilerParams(
            dimension_semantics=("parallel", "arbitrary"),
            vmem_limit_bytes=32 * 1024 * 1024,
        ),
        cost_estimate=pl.CostEstimate(
            flops=2 * rows * WIDTH,
            transcendentals=0,
            bytes_accessed=rows * WIDTH * 4 + WIDTH * 4 + NUM_CORES * 8 * 128 * 4,
        ),
    )(x2d, wrow)
    # One partial per core, written at out[8*c, 0].
    return sum(out[8 * c, 0] for c in range(NUM_CORES))


def linear_sum(x, weight, bias, *, block_rows: int = 4096):
    """x: (N, 3), weight: (1, 3) or (3,), bias: (1,) -> scalar sum(Linear(x))."""
    n, k = x.shape
    assert k == 3
    x = x.astype(jnp.float32)
    w = jnp.asarray(weight, jnp.float32).reshape(3)
    b = jnp.asarray(bias, jnp.float32).reshape(())

    n_main = (n // 128) * 128          # rows forming whole lane-dense 384-wide rows
    rows = n_main // 128

    total = jnp.float32(n) * b         # bias contributes exactly once per row
    if n_main < n:
        # < 128 leftover rows: reduce in plain JAX (tiny), avoids any padding copy.
        total = total + jnp.sum(x[n_main:, :] * w)
    if rows > 0:
        # Zero-copy metadata reshape when n % 128 == 0 (aliases x's HBM buffer).
        # When unaligned, the prefix slice may copy; the <128-row tail above is JAX.
        x_main = x if n_main == n else x[:n_main, :]
        x2d = x_main.reshape(rows, WIDTH)
        wrow = jnp.tile(w, WIDTH // 3).reshape(1, WIDTH)   # lane j holds w[j % 3]
        total = total + _pallas_weighted_sum(x2d, wrow, block_rows)
    return total


if __name__ == "__main__":
    key = jax.random.PRNGKey(0)
    kx, kw, kb = jax.random.split(key, 3)

    # Linear(3, 1) parameters, torch-style init U(-1/sqrt(3), 1/sqrt(3)).
    bound = 1.0 / jnp.sqrt(3.0)
    W = jax.random.uniform(kw, (1, 3), minval=-bound, maxval=bound, dtype=jnp.float32)
    b = jax.random.uniform(kb, (1,), minval=-bound, maxval=bound, dtype=jnp.float32)

    def reference(xx):
        return jnp.sum(xx @ W.T + b)

    # Primary small example: N multiple of 128 -> zero-copy fast path.
    x = jax.random.normal(kx, (1024, 3), dtype=jnp.float32)
    out = linear_sum(x, W, b)
    jax.block_until_ready(out)
    assert jnp.allclose(out, reference(x), rtol=1e-4, atol=1e-3), (out, reference(x))

    # Unaligned N: main part through the kernel, <128-row tail in plain JAX.
    x2 = jax.random.normal(jax.random.fold_in(kx, 1), (2000, 3), dtype=jnp.float32)
    out2 = linear_sum(x2, W, b)
    jax.block_until_ready(out2)
    assert jnp.allclose(out2, reference(x2), rtol=1e-4, atol=1e-3), (out2, reference(x2))

    # Multi-block / partial-last-block / both-core path (tiny tiles on purpose).
    x3 = jax.random.normal(jax.random.fold_in(kx, 2), (4736, 3), dtype=jnp.float32)
    out3 = linear_sum(x3, W, b, block_rows=8)
    jax.block_until_ready(out3)
    assert jnp.allclose(out3, reference(x3), rtol=1e-4, atol=1e-3), (out3, reference(x3))

    # Tiny N (< 128): handled entirely by the plain-JAX tail path.
    x4 = jax.random.normal(jax.random.fold_in(kx, 3), (8, 3), dtype=jnp.float32)
    out4 = linear_sum(x4, W, b)
    jax.block_until_ready(out4)
    assert jnp.allclose(out4, reference(x4), rtol=1e-4, atol=1e-3), (out4, reference(x4))

    print("KERNEL_OK")
</pallas_src>

<mosaic_0001>
module attributes {stable_mosaic.version = 11 : i64} {
  func.func @kernel(%arg0: i32, %arg1: i32, %arg2: memref<8x384xf32, #tpu.memory_space<vmem>>, %arg3: memref<1x384xf32, #tpu.memory_space<vmem>>, %arg4: memref<8x128xf32, #tpu.memory_space<vmem>>, %arg5: memref<8x384xf32, #tpu.memory_space<vmem>>) attributes {dimension_semantics = [#tpu.dimension_semantics<parallel>, #tpu.dimension_semantics<arbitrary>], iteration_bounds = array<i64: 2, 1>, scalar_prefetch = 0 : i64, scratch_operands = 1 : i64, tpu.core_type = #tpu.core_type<tc>, window_params = [{transform_indices = @transform_0, window_bounds = array<i64: 8, 384>}, {pipeline_mode = #tpu.pipeline_mode<synchronous>, transform_indices = @transform_1, window_bounds = array<i64: 1, 384>}, {transform_indices = @transform_2, window_bounds = array<i64: 8, 128>}]} {
    %c1_i32 = arith.constant 1 : i32
    %0 = arith.muli %arg0, %c1_i32 : i32
    %1 = arith.addi %0, %arg1 : i32
    %c0_i32 = arith.constant 0 : i32
    %2 = arith.cmpi eq, %arg1, %c0_i32 : i32
    %3 = arith.extui %2 : i1 to i32
    %c0_i32_0 = arith.constant 0 : i32
    %4 = arith.cmpi ne, %3, %c0_i32_0 : i32
    scf.if %4 {
      %cst = arith.constant 0.000000e+00 : f32
      %11 = vector.broadcast %cst : f32 to vector<8x384xf32>
      %c0 = arith.constant 0 : index
      %c0_5 = arith.constant 0 : index
      %12 = vector.load %arg5[%c0, %c0_5] : memref<8x384xf32, #tpu.memory_space<vmem>>, vector<8x384xf32>
      tpu.vector_store %arg5[%c0, %c0_5], %11 {strides = array<i32>} : memref<8x384xf32, #tpu.memory_space<vmem>>, vector<8x384xf32>,
    } else {
    }
    %c1_i32_1 = arith.constant 1 : i32
    %5 = arith.cmpi slt, %1, %c1_i32_1 : i32
    %6 = arith.extui %5 : i1 to i32
    %c0_i32_2 = arith.constant 0 : i32
    %7 = arith.cmpi ne, %6, %c0_i32_2 : i32
    scf.if %7 {
      %c0 = arith.constant 0 : index
      %c0_5 = arith.constant 0 : index
      %11 = vector.load %arg5[%c0, %c0_5] : memref<8x384xf32, #tpu.memory_space<vmem>>, vector<8x384xf32>
      %c0_6 = arith.constant 0 : index
      %c0_7 = arith.constant 0 : index
      %12 = vector.load %arg2[%c0_6, %c0_7] : memref<8x384xf32, #tpu.memory_space<vmem>>, vector<8x384xf32>
      %13 = vector.shape_cast %12 : vector<8x384xf32> to vector<1x8x384xf32>
      %cst = arith.constant dense<0.000000e+00> : vector<8x384xf32>
      %14 = vector.multi_reduction <add>, %13, %cst [0] : vector<1x8x384xf32> to vector<8x384xf32>
      %15 = arith.addf %11, %14 : vector<8x384xf32>
      %c0_8 = arith.constant 0 : index
      %c0_9 = arith.constant 0 : index
      %16 = vector.load %arg5[%c0_8, %c0_9] : memref<8x384xf32, #tpu.memory_space<vmem>>, vector<8x384xf32>
      tpu.vector_store %arg5[%c0_8, %c0_9], %15 {strides = array<i32>} : memref<8x384xf32, #tpu.memory_space<vmem>>, vector<8x384xf32>,
    } else {
    }
    %c0_i32_3 = arith.constant 0 : i32
    %8 = arith.cmpi eq, %arg1, %c0_i32_3 : i32
    %9 = arith.extui %8 : i1 to i32
    %c0_i32_4 = arith.constant 0 : i32
    %10 = arith.cmpi ne, %9, %c0_i32_4 : i32
    scf.if %10 {
      %c0 = arith.constant 0 : index
      %c0_5 = arith.constant 0 : index
      %11 = vector.load %arg5[%c0, %c0_5] : memref<8x384xf32, #tpu.memory_space<vmem>>, vector<8x384xf32>
      %c0_6 = arith.constant 0 : index
      %c0_7 = arith.constant 0 : index
      %12 = vector.load %arg3[%c0_6, %c0_7] : memref<1x384xf32, #tpu.memory_space<vmem>>, vector<1x384xf32>
      %13 = vector.broadcast %12 : vector<1x384xf32> to vector<8x384xf32>
      %14 = arith.mulf %11, %13 : vector<8x384xf32>
      %15 = vector.shape_cast %14 : vector<8x384xf32> to vector<1x8x384xf32>
      %cst = arith.constant dense<0.000000e+00> : vector<1xf32>
      %16 = vector.multi_reduction <add>, %15, %cst [1, 2] : vector<1x8x384xf32> to vector<1xf32>
      %17 = vector.shape_cast %16 : vector<1xf32> to vector<1x1x1xf32>
      %18 = vector.extract %17[0, 0, 0] : f32 from vector<1x1x1xf32>
      %cst_8 = arith.constant 0.000000e+00 : f32
      %19 = vector.broadcast %cst_8 : f32 to vector<8x128xf32>
      %20 = vector.broadcast %18 : f32 to vector<8x128xf32>
      %21 = arith.addf %19, %20 : vector<8x128xf32>
      %c0_9 = arith.constant 0 : index
      %c0_10 = arith.constant 0 : index
      %22 = vector.load %arg4[%c0_9, %c0_10] : memref<8x128xf32, #tpu.memory_space<vmem>>, vector<8x128xf32>
      tpu.vector_store %arg4[%c0_9, %c0_10], %21 {strides = array<i32>} : memref<8x128xf32, #tpu.memory_space<vmem>>, vector<8x128xf32>,
    } else {
    }
    return
  }
  func.func @transform_0(%arg0: i32, %arg1: i32) -> (i32, i32) {
    %c1_i32 = arith.constant 1 : i32
    %0 = arith.muli %arg0, %c1_i32 : i32
    %1 = arith.addi %0, %arg1 : i32
    %c0_i32 = arith.constant 0 : i32
    %2 = arith.minsi %1, %c0_i32 : i32
    %c0_i32_0 = arith.constant 0 : i32
    %c0_i32_1 = arith.constant 0 : i32
    return %2, %c0_i32_0 : i32, i32
  }
  func.func @transform_1(%arg0: i32, %arg1: i32) -> (i32, i32) {
    %c0_i32 = arith.constant 0 : i32
    %c0_i32_0 = arith.constant 0 : i32
    %c0_i32_1 = arith.constant 0 : i32
    return %c0_i32, %c0_i32_0 : i32, i32
  }
  func.func @transform_2(%arg0: i32, %arg1: i32) -> (i32, i32) {
    %c0_i32 = arith.constant 0 : i32
    %c0_i32_0 = arith.constant 0 : i32
    return %arg0, %c0_i32 : i32, i32
  }
}

</mosaic_0001>

<llo_original>
// kernel: tpu_custom_call.1
$region0: #{tpu_custom_call.1}
  #allocation0 [shape = 'u32[]', space=smem, size = 0x4, offset = 0x4, fixed_abs, tag = 'smem constant byte address 0x4 - core index']
  #allocation1 [shape = 'u32[144,128]{1,0:T(1,128)}', space=vmem, size = 0x12000, scoped, tag = 'internal scratch']
  #allocation2 [shape = 'f32[8,384]{1,0:T(8,128)}', space=vmem, size = 0x3000, scoped, tag = 'scratch operand']
  %s0 = inlined_call_operand.hbm [shape: f32[8,384], index: 0, kind: input, shape index: {}]
  %s1 = inlined_call_operand.vmem [shape: f32[1,384], index: 1, kind: input, shape index: {}]
  %s2 = inlined_call_operand.hbm [shape: f32[16,128], index: 2, kind: output, shape index: {}]
  %s3 = sld [smem:[#allocation0]]
  $region57: #{tpu_custom_call.1} parent=0
    _
  %s5 = ssub.s32 1, %s3
  %s6 = scalar_select 0, %s5, %s3
  $region1: #{tpu_custom_call.1} parent=0
    #allocation3 [shape = 'u8[24576]{0}', space=vmem, size = 0x6000, scoped, tag = 'input window, operand 0']
    #allocation4 [shape = 's32[2]{0}', space=sflag, size = 0x8, scoped, tag = 'scoped memory for tpu_custom_call.1']
    #allocation5 [shape = 's32[2]{0}', space=sflag, size = 0x8, scoped, tag = 'scoped memory for tpu_custom_call.1']
    #allocation6 [shape = 'u8[8192]{0}', space=vmem, size = 0x2000, scoped, tag = 'output window, operand 0']
    %7 = vsyncpa [#allocation4], 0
    %s8 = scalar_lea.sflag [#allocation4], 1
    %9 = vsyncpa %s8, 0
    %10 = vsyncpa [#allocation5], 0
    %s11 = scalar_lea.sflag [#allocation5], 1
    %12 = vsyncpa %s11, 0
    loop: start=0, step=1, limit=4
    $region2: #{tpu_custom_call.1} parent=1 // loop_pre_header
      _
    $region3: #{tpu_custom_call.1} parent=1 // loop_header
      %s14 = sphi 0, %s18
      %p15 = scmp.ge.s32.totalorder %s14, 4
      %s21 = sphi 0, %s33
      %s22 = sphi 0, %s29
      %s23 = sphi 0, %s21
      %s24 = sphi 0, %s22
      %s25 = sphi 0, %s23
      %s26 = sphi 0, %s24
      %s42 = sphi 0, %s44
      %s45 = sphi 0, %s42
      %s46 = sphi 0, %s45
      %s62 = sphi 0, %s46
      %s66 = sphi 0, %s66
      %s68 = sphi 0, %s66
      %s69 = sphi 0, %s68
      %s83 = sphi 0, %s69
      %s89 = sphi 0, %s91
      %s92 = sphi 0, %s89
      %s93 = sphi 0, %s92
      %s109 = sphi 0, %s93
    $region4: #{tpu_custom_call.1} parent=1 // loop_header_branch
      %17 = sbr.rel (%p15) target = $region8
    $region5: #{tpu_custom_call.1} parent=1 // loop_body
      %s19 = ssub.s32 %s14, 1
      %s20 = ssub.s32 %s14, 2
      %s27 = sadd.s32 1, %s22
      %p28 = scmp.ge.s32.totalorder %s27, 1
      %s29 = scalar_select %p28, 0, %s27
      %s30 = sadd.s32 1, %s21
      %s31 = scalar_select %p28, %s30, %s21
      %p32 = scmp.ge.s32.totalorder %s31, 2
      %s33 = scalar_select %p32, 0, %s31
      %s34 = sadd.s32 %s21, %s22
      %p35 = scmp.lt.s32.totalorder %s34, 0
      %s36 = scalar_select %p35, %s34, 0
      %s37 = sadd.s32 %s33, %s29
      %p38 = scmp.lt.s32.totalorder %s37, 0
      %s39 = scalar_select %p38, %s37, 0
      %s40 = ssub.s32 %s36, %s39
      %p41 = scmp.eq.s32.totalorder %s40, 0
      %s43 = sadd.s32 %s42, 1
      %s44 = scalar_select %p41, %s42, %s43
      %p47 = pneg %p41
      %p48 = scmp.eq.s32.totalorder %s14, 1
      %p49 = por %p47, %p48
      %p50 = scmp.ne.s32.totalorder %s42, %s45
      %p51 = scmp.eq.s32.totalorder %s14, 0
      %p52 = por %p50, %p51
      %p53 = scmp.ne.s32.totalorder %s42, %s45
      %p54 = scmp.eq.s32.totalorder %s19, 1
      %p55 = por %p53, %p54
      %p56 = scmp.ne.s32.totalorder %s45, %s46
      %p57 = scmp.eq.s32.totalorder %s19, 0
      %p58 = por %p56, %p57
      %p59 = scmp.ne.s32.totalorder %s45, %s46
      %p60 = scmp.eq.s32.totalorder %s20, 1
      %p61 = por %p59, %p60
      %p63 = scmp.ne.s32.totalorder %s46, %s62
      %p64 = scmp.eq.s32.totalorder %s20, 0
      %p65 = por %p63, %p64
      %s67 = sadd.s32 %s66, 1
      %p70 = scmp.eq.s32.totalorder %s14, 1
      %p71 = scmp.ne.s32.totalorder %s66, %s68
      %p72 = scmp.eq.s32.totalorder %s14, 0
      %p73 = por %p71, %p72
      %p74 = scmp.ne.s32.totalorder %s66, %s68
      %p75 = scmp.eq.s32.totalorder %s19, 1
      %p76 = por %p74, %p75
      %p77 = scmp.ne.s32.totalorder %s68, %s69
      %p78 = scmp.eq.s32.totalorder %s19, 0
      %p79 = por %p77, %p78
      %p80 = scmp.ne.s32.totalorder %s68, %s69
      %p81 = scmp.eq.s32.totalorder %s20, 1
      %p82 = por %p80, %p81
      %p84 = scmp.ne.s32.totalorder %s69, %s83
      %p85 = scmp.eq.s32.totalorder %s20, 0
      %p86 = por %p84, %p85
      %s87 = ssub.s32 %s21, %s33
      %p88 = scmp.eq.s32.totalorder %s87, 0
      %s90 = sadd.s32 %s89, 1
      %s91 = scalar_select %p88, %s89, %s90
      %p94 = pneg %p88
      %p95 = scmp.eq.s32.totalorder %s14, 1
      %p96 = por %p94, %p95
      %p97 = scmp.ne.s32.totalorder %s89, %s92
      %p98 = scmp.eq.s32.totalorder %s14, 0
      %p99 = por %p97, %p98
      %p100 = scmp.ne.s32.totalorder %s89, %s92
      %p101 = scmp.eq.s32.totalorder %s19, 1
      %p102 = por %p100, %p101
      %p103 = scmp.ne.s32.totalorder %s92, %s93
      %p104 = scmp.eq.s32.totalorder %s19, 0
      %p105 = por %p103, %p104
      %p106 = scmp.ne.s32.totalorder %s92, %s93
      %p107 = scmp.eq.s32.totalorder %s20, 1
      %p108 = por %p106, %p107
      %p110 = scmp.ne.s32.totalorder %s93, %s109
      %p111 = scmp.eq.s32.totalorder %s20, 0
      %p112 = por %p110, %p111
      %p113 = scmp.le.s32.totalorder 1, %s14
      %p114 = scmp.lt.s32.totalorder %s14, 3
      %p115 = pnand %p113, %p114
      %p116 = pneg %p115
      // Predicated region
      $region9: #{tpu_custom_call.1} parent=5 // pred_check
        _
      $region10: #{tpu_custom_call.1} parent=5 // pred_check_branch
        %118 = sbr.rel (%p115) target = $region12
      $region11: #{tpu_custom_call.1} parent=5 // pred_region
        %s119 = ssub.s32 %s14, 1
        // Predicated region
        $region13: #{tpu_custom_call.1} parent=11 // pred_check
          %p120 = pneg %p79
        $region14: #{tpu_custom_call.1} parent=11 // pred_check_branch
          %122 = sbr.rel (%p120) target = $region16
        $region15: #{tpu_custom_call.1} parent=11 // pred_region
          _
        $region16: #{tpu_custom_call.1} parent=11 // pred_fallthru
          _
      $region12: #{tpu_custom_call.1} parent=5 // pred_fallthru
        _
      %p123 = scmp.lt.s32.totalorder %s14, 2
      // Predicated region
      $region17: #{tpu_custom_call.1} parent=5 // pred_check
        %p124 = pneg %p123
      $region18: #{tpu_custom_call.1} parent=5 // pred_check_branch
        %126 = sbr.rel (%p124) target = $region20
      $region19: #{tpu_custom_call.1} parent=5 // pred_region
        // Predicated region
        $region21: #{tpu_custom_call.1} parent=19 // pred_check
          %p127 = pneg %p52
        $region22: #{tpu_custom_call.1} parent=19 // pred_check_branch
          %129 = sbr.rel (%p127) target = $region24
        $region23: #{tpu_custom_call.1} parent=19 // pred_region
          %s130 = sand.u32 %s42, 1
          %s131 = scalar_lea.sflag [#allocation4], %s130
          %s132 = sand.u32 %s42, 1
          %s133 = smul.addr %s132, 24
          %s134 = scalar_lea.vmem [#allocation3], %s133
          %s135 = sadd.s32 %s21, %s22
          %p136 = scmp.lt.s32.totalorder %s135, 0
          %s137 = scalar_select %p136, %s135, 0
          %s139 = ssub.s32 384, 384
          %140 = vsyncadd %s131, %s139
          %s141 = smul.addr %s137, 3
          %s142 = smul.addr %s141, 128
          %s143 = scalar_lea.hbm %s0, %s142
          %s145 = sshll.u32 %s134, 4
          %s146 = int_to_ptr.vmem [resolvable:$true] %s145
          %148 = dma.hbm_to_vmem [thread:$0]  %s143, 384, %s146, %s131
        $region24: #{tpu_custom_call.1} parent=19 // pred_fallthru
          _
      $region20: #{tpu_custom_call.1} parent=5 // pred_fallthru
        _
      %p149 = scmp.le.s32.totalorder 1, %s14
      %p150 = scmp.lt.s32.totalorder %s14, 3
      %p151 = pnand %p149, %p150
      %p152 = pneg %p151
      // Predicated region
      $region25: #{tpu_custom_call.1} parent=5 // pred_check
        _
      $region26: #{tpu_custom_call.1} parent=5 // pred_check_branch
        %154 = sbr.rel (%p151) target = $region28
      $region27: #{tpu_custom_call.1} parent=5 // pred_region
        %s155 = ssub.s32 %s14, 1
        %s156 = sand.u32 %s45, 1
        %s157 = scalar_lea.sflag [#allocation4], %s156
        %s158 = sand.u32 %s45, 1
        %s159 = smul.addr %s158, 24
        %s160 = scalar_lea.vmem [#allocation3], %s159
        // Predicated region
        $region29: #{tpu_custom_call.1} parent=27 // pred_check
          %p161 = pneg %p58
        $region30: #{tpu_custom_call.1} parent=27 // pred_check_branch
          %163 = sbr.rel (%p161) target = $region32
        $region31: #{tpu_custom_call.1} parent=27 // pred_region
          %164 = dma.done %s157, 384
        $region32: #{tpu_custom_call.1} parent=27 // pred_fallthru
          _
        %s165 = sand.u32 %s45, 1
        %s166 = scalar_lea.sflag [#allocation4], %s165
        %s167 = sand.u32 %s45, 1
        %s168 = smul.addr %s167, 24
        %s169 = scalar_lea.vmem [#allocation3], %s168
        %p170 = pneg %p58
        %p171 = pneg %p55
        %p172 = pneg %p79
        %p173 = pneg %p76
        %p174 = pneg %p105
        %p175 = pneg %p102
        %s176 = sand.u32 %s92, 1
        %s177 = scalar_lea.sflag [#allocation5], %s176
        %s178 = sand.u32 %s92, 1
        %s179 = smul.addr %s178, 8
        %s180 = scalar_lea.vmem [#allocation6], %s179
        %s181 = sadd.s32 %s23, %s24
        %p182 = scmp.lt.s32.totalorder %s181, 0
        %s183 = scalar_select %p182, %s181, 0
        %s184 = sadd.s32 %s23, %s24
        %p185 = scmp.eq.s32.totalorder %s24, 0
        // Predicated region
        $region33: #{tpu_custom_call.1} parent=27 // pred_check
          %p186 = pneg %p185
        $region34: #{tpu_custom_call.1} parent=27 // pred_check_branch
          %188 = sbr.rel (%p186) target = $region36
        $region35: #{tpu_custom_call.1} parent=27 // pred_region
          %189 = vst [vmem:[#allocation2] sm:$0xff] 0.0
          %190 = vst [vmem:[#allocation2 + $0x8] sm:$0xff] 0.0
          %191 = vst [vmem:[#allocation2 + $0x10] sm:$0xff] 0.0
        $region36: #{tpu_custom_call.1} parent=27 // pred_fallthru
          _
        %p192 = scmp.lt.s32.totalorder %s184, 1
        // Predicated region
        $region37: #{tpu_custom_call.1} parent=27 // pred_check
          %p193 = pneg %p192
        $region38: #{tpu_custom_call.1} parent=27 // pred_check_branch
          %195 = sbr.rel (%p193) target = $region40
        $region39: #{tpu_custom_call.1} parent=27 // pred_region
          %v196 = vld [vmem:[#allocation2] sm:$0xff]
          %v197 = vld [vmem:[#allocation2 + $0x8] sm:$0xff]
          %v198 = vld [vmem:[#allocation2 + $0x10] sm:$0xff]
          %v199 = vld [vmem:[%s160] sm:$0xff]
          %v200 = vld [vmem:[%s160 + $0x8] sm:$0xff]
          %v201 = vld [vmem:[%s160 + $0x10] sm:$0xff]
          %v202 = vadd.f32 %v199, 0.0
          %v203 = vadd.f32 %v200, 0.0
          %v204 = vadd.f32 %v201, 0.0
          %v205 = vadd.f32 %v196, %v202
          %v206 = vadd.f32 %v197, %v203
          %v207 = vadd.f32 %v198, %v204
          %208 = vst [vmem:[#allocation2] sm:$0xff] %v205
          %209 = vst [vmem:[#allocation2 + $0x8] sm:$0xff] %v206
          %210 = vst [vmem:[#allocation2 + $0x10] sm:$0xff] %v207
        $region40: #{tpu_custom_call.1} parent=27 // pred_fallthru
          _
        // Predicated region
        $region41: #{tpu_custom_call.1} parent=27 // pred_check
          %p211 = pneg %p185
        $region42: #{tpu_custom_call.1} parent=27 // pred_check_branch
          %213 = sbr.rel (%p211) target = $region44
        $region43: #{tpu_custom_call.1} parent=27 // pred_region
          %v214 = vld [vmem:[#allocation2] sm:$0xff]
          %v215 = vld [vmem:[#allocation2 + $0x8] sm:$0xff]
          %v216 = vld [vmem:[#allocation2 + $0x10] sm:$0xff]
          %v217 = vld [vmem:[%s1] sm:$0x7]
          %v219 = vlaneseq
          %v220 = vshrl.u32 %v219, 7
          %v221 = vsub.s32 0, %v220
          %v222 = vrot.slane %v217, %v221
          %v223 = vlaneseq
          %v224 = vshrl.u32 %v223, 7
          %v225 = vsub.s32 1, %v224
          %v226 = vrot.slane %v217, %v225
          %v227 = vlaneseq
          %v228 = vshrl.u32 %v227, 7
          %v229 = vsub.s32 2, %v228
          %v230 = vrot.slane %v217, %v229
          %v234 = vmul.f32 %v214, %v222
          %v235 = vmul.f32 %v215, %v226
          %v236 = vmul.f32 %v216, %v230
          %v237 = vadd.f32 %v234, %v235
          %v238 = vadd.f32 %v237, %v236
          %239 = vadd.xlane.f32.xlu0 %v238
          %v240 = vpop.xlane.xlu0 %239
          %v241 = vrot.slane %v240, 4
          %v242 = vadd.f32 %v240, %v241
          %v243 = vrot.slane %v242, 2
          %v244 = vadd.f32 %v242, %v243
          %v245 = vrot.slane %v244, 1
          %v246 = vadd.f32 %v244, %v245
          %s247 = vtos %v246
          %v248 = vstv %s247
          %v249 = vadd.f32 %v248, 0.0
          %250 = vst [vmem:[%s180] sm:$0xff] %v249
        $region44: #{tpu_custom_call.1} parent=27 // pred_fallthru
          _
        %s251 = sand.u32 %s92, 1
        %s252 = scalar_lea.sflag [#allocation5], %s251
        %s253 = sand.u32 %s92, 1
        %s254 = smul.addr %s253, 8
        %s255 = scalar_lea.vmem [#allocation6], %s254
        // Predicated region
        $region45: #{tpu_custom_call.1} parent=27 // pred_check
          %p256 = pneg %p102
        $region46: #{tpu_custom_call.1} parent=27 // pred_check_branch
          %258 = sbr.rel (%p256) target = $region48
        $region47: #{tpu_custom_call.1} parent=27 // pred_region
          %s260 = ssub.s32 128, 128
          %261 = vsyncadd %s252, %s260
          %s262 = smul.addr %s23, 128
          %s263 = scalar_lea.hbm %s2, %s262
          %s265 = sshll.u32 %s255, 4
          %s266 = int_to_ptr.vmem [resolvable:$true] %s265
          %268 = dma.vmem_to_hbm [thread:$0]  %s266, 128, %s263, %s252
        $region48: #{tpu_custom_call.1} parent=27 // pred_fallthru
          _
      $region28: #{tpu_custom_call.1} parent=5 // pred_fallthru
        _
      %p269 = scmp.le.s32.totalorder 2, %s14
      // Predicated region
      $region49: #{tpu_custom_call.1} parent=5 // pred_check
        %p270 = pneg %p269
      $region50: #{tpu_custom_call.1} parent=5 // pred_check_branch
        %272 = sbr.rel (%p270) target = $region52
      $region51: #{tpu_custom_call.1} parent=5 // pred_region
        %s273 = ssub.s32 %s14, 2
        // Predicated region
        $region53: #{tpu_custom_call.1} parent=51 // pred_check
          %p274 = pneg %p108
        $region54: #{tpu_custom_call.1} parent=51 // pred_check_branch
          %276 = sbr.rel (%p274) target = $region56
        $region55: #{tpu_custom_call.1} parent=51 // pred_region
          %s277 = sand.u32 %s93, 1
          %s278 = scalar_lea.sflag [#allocation5], %s277
          %s279 = sand.u32 %s93, 1
          %s280 = smul.addr %s279, 8
          %s281 = scalar_lea.vmem [#allocation6], %s280
          %282 = dma.done %s278, 128
        $region56: #{tpu_custom_call.1} parent=51 // pred_fallthru
          _
      $region52: #{tpu_custom_call.1} parent=5 // pred_fallthru
        _
    $region6: #{tpu_custom_call.1} parent=1 // loop_footer
      %s18 = sadd.s32 1, %s14
    $region7: #{tpu_custom_call.1} parent=1 // loop_footer_branch
      %13 = sbr.rel target = $region3
    $region8: #{tpu_custom_call.1} parent=1 // loop_exit
      _
    %283 = vsyncpa [#allocation4], 1
    %s284 = scalar_lea.sflag [#allocation4], 1
    %285 = vsyncpa %s284, 1
    %286 = vsyncpa [#allocation5], 1
    %s287 = scalar_lea.sflag [#allocation5], 1
    %288 = vsyncpa %s287, 1

</llo_original>
